<compile_context>
chip_gen: v7x
topology: tpu7x:2x2x1
jax: 0.10.0
libtpu: 0.0.40
codegen_flags: <defaults>
</compile_context>

<pallas_src>
import functools

import jax
import jax.numpy as jnp
from jax.experimental import pallas as pl
from jax.experimental.pallas import tpu as pltpu


# Fused path budget: 2(double-buffer) x 2(in+out) x C*HW x 4B resident per step.
_FUSED_VMEM_BUDGET = 32 << 20      # == C*HW <= 2M f32 elements (v7x-safe)
# Fallback tiles target: stay under the v5e 16 MiB default scoped VMEM.
_FALLBACK_VMEM_BUDGET = 12 << 20


# ---------------------------------------------------------------------------
# Kernels
# ---------------------------------------------------------------------------

def _fused_se_gate_kernel(xl_ref, xg_ref, w1_ref, b1_ref, w2_ref, b2_ref,
                          yl_ref, yg_ref):
    """Fused squeeze-excite + gating for one batch element (full slab in VMEM).

    xl/xg : (1, in_cl, HW) / (1, in_cg, HW)   NCHW-flattened views
    w1    : (Ch, C)   conv1 weight   (b1: (Ch, 1))
    w2    : (C, Ch)   [conv_a2l ; conv_a2g] stacked (b2: (C, 1))
    yl/yg : (1, in_cl, HW) / (1, in_cg, HW)   gated outputs
    """
    xl = xl_ref[0]                                               # (in_cl, HW)
    xg = xg_ref[0]                                               # (in_cg, HW)
    in_cl = xl.shape[0]

    # Global average pool over the lane (H*W) axis -> one (C, 1) column.
    p = jnp.concatenate(
        [jnp.mean(xl, axis=-1, keepdims=True),
         jnp.mean(xg, axis=-1, keepdims=True)], axis=0)          # (C, 1)

    # conv1 (1x1) + bias + ReLU, column oriented.
    h = jnp.dot(w1_ref[...], p, preferred_element_type=jnp.float32) + b1_ref[...]
    h = jnp.maximum(h, 0.0)                                      # (Ch, 1)

    # conv_a2l / conv_a2g fused as one matmul, bias, sigmoid.
    z = jnp.dot(w2_ref[...], h, preferred_element_type=jnp.float32) + b2_ref[...]
    g = jax.nn.sigmoid(z)                                        # (C, 1)

    # Gate in place while the slab is still resident (1 read + 1 write of x).
    yl_ref[0] = xl * g[:in_cl]
    yg_ref[0] = xg * g[in_cl:]


def _se_gates_kernel(xl_ref, xg_ref, w1_ref, b1_ref, w2_ref, b2_ref,
                     g_ref, acc_ref, *, inv_hw):
    """HW-tiled pooling + SE head (fallback for slabs that don't fit VMEM).

    Grid: (B, HW//t) with the HW axis innermost / "arbitrary".
    acc_ref : (C, 1) f32 scratch accumulator of per-channel sums.
    g_ref   : (1, C, 1) sigmoid gates, written at the last HW step.
    """
    k = pl.program_id(1)

    @pl.when(k == 0)
    def _():
        acc_ref[...] = jnp.zeros_like(acc_ref)

    acc_ref[...] += jnp.concatenate(
        [jnp.sum(xl_ref[0], axis=-1, keepdims=True),
         jnp.sum(xg_ref[0], axis=-1, keepdims=True)], axis=0)    # (C, 1)

    @pl.when(k == pl.num_programs(1) - 1)
    def _():
        p = acc_ref[...] * inv_hw                                # (C, 1)
        h = jnp.dot(w1_ref[...], p, preferred_element_type=jnp.float32) + b1_ref[...]
        h = jnp.maximum(h, 0.0)
        z = jnp.dot(w2_ref[...], h, preferred_element_type=jnp.float32) + b2_ref[...]
        g_ref[0] = jax.nn.sigmoid(z)


def _gate_apply_kernel(xl_ref, xg_ref, gl_ref, gg_ref, yl_ref, yg_ref):
    """Lane-dense channel gating for both branches in one grid step."""
    yl_ref[...] = xl_ref[...] * gl_ref[...]
    yg_ref[...] = xg_ref[...] * gg_ref[...]


# ---------------------------------------------------------------------------
# Tile selection
# ---------------------------------------------------------------------------

def _choose_hw_tile(hw, bytes_per_hw_col, budget=_FALLBACK_VMEM_BUDGET):
    """Largest t dividing hw with t*bytes_per_hw_col <= budget (prefer k*128)."""
    if hw * bytes_per_hw_col <= budget:
        return hw
    limit = max(int(budget // bytes_per_hw_col), 1)
    t = (limit // 128) * 128
    while t >= 128:
        if hw % t == 0:
            return t
        t -= 128
    t = min(limit, hw)
    while t > 1 and hw % t != 0:
        t -= 1
    return max(t, 1)


# ---------------------------------------------------------------------------
# pallas_call wrappers
# ---------------------------------------------------------------------------

def fused_se_gate(xl3, xg3, w1, b1, w2, b2):
    B, in_cl, HW = xl3.shape
    in_cg = xg3.shape[1]
    C, Ch = w2.shape
    fused_bytes = 16 * C * HW            # 2 buffers x (in + out) x f32
    return pl.pallas_call(
        _fused_se_gate_kernel,
        out_shape=(jax.ShapeDtypeStruct((B, in_cl, HW), xl3.dtype),
                   jax.ShapeDtypeStruct((B, in_cg, HW), xg3.dtype)),
        grid=(B,),
        in_specs=[
            pl.BlockSpec((1, in_cl, HW), lambda b: (b, 0, 0)),
            pl.BlockSpec((1, in_cg, HW), lambda b: (b, 0, 0)),
            pl.BlockSpec((Ch, C), lambda b: (0, 0)),
            pl.BlockSpec((Ch, 1), lambda b: (0, 0)),
            pl.BlockSpec((C, Ch), lambda b: (0, 0)),
            pl.BlockSpec((C, 1), lambda b: (0, 0)),
        ],
        out_specs=[
            pl.BlockSpec((1, in_cl, HW), lambda b: (b, 0, 0)),
            pl.BlockSpec((1, in_cg, HW), lambda b: (b, 0, 0)),
        ],
        compiler_params=pltpu.CompilerParams(
            dimension_semantics=("parallel",),
            vmem_limit_bytes=min(fused_bytes + (8 << 20), 44 << 20)),
    )(xl3, xg3, w1, b1, w2, b2)


def se_gates_tiled(xl3, xg3, w1, b1, w2, b2):
    B, in_cl, HW = xl3.shape
    in_cg = xg3.shape[1]
    C, Ch = w2.shape
    t = _choose_hw_tile(HW, 8 * C)       # 2 buffers x C channels x 4 B per column
    kern = functools.partial(_se_gates_kernel, inv_hw=1.0 / HW)
    return pl.pallas_call(
        kern,
        out_shape=jax.ShapeDtypeStruct((B, C, 1), jnp.float32),
        grid=(B, HW // t),
        in_specs=[
            pl.BlockSpec((1, in_cl, t), lambda b, k: (b, 0, k)),
            pl.BlockSpec((1, in_cg, t), lambda b, k: (b, 0, k)),
            pl.BlockSpec((Ch, C), lambda b, k: (0, 0)),
            pl.BlockSpec((Ch, 1), lambda b, k: (0, 0)),
            pl.BlockSpec((C, Ch), lambda b, k: (0, 0)),
            pl.BlockSpec((C, 1), lambda b, k: (0, 0)),
        ],
        out_specs=pl.BlockSpec((1, C, 1), lambda b, k: (b, 0, 0)),
        scratch_shapes=[pltpu.VMEM((C, 1), jnp.float32)],
        compiler_params=pltpu.CompilerParams(
            dimension_semantics=("parallel", "arbitrary")),
    )(xl3, xg3, w1, b1, w2, b2)


def gate_apply(xl3, xg3, gl, gg):
    B, in_cl, HW = xl3.shape
    in_cg = xg3.shape[1]
    C = in_cl + in_cg
    t = _choose_hw_tile(HW, 16 * C)      # 2 buffers x (in+out) x C x 4 B per column
    return pl.pallas_call(
        _gate_apply_kernel,
        out_shape=(jax.ShapeDtypeStruct((B, in_cl, HW), xl3.dtype),
                   jax.ShapeDtypeStruct((B, in_cg, HW), xg3.dtype)),
        grid=(B, HW // t),
        in_specs=[
            pl.BlockSpec((1, in_cl, t), lambda b, k: (b, 0, k)),
            pl.BlockSpec((1, in_cg, t), lambda b, k: (b, 0, k)),
            pl.BlockSpec((1, in_cl, 1), lambda b, k: (b, 0, 0)),
            pl.BlockSpec((1, in_cg, 1), lambda b, k: (b, 0, 0)),
        ],
        out_specs=[
            pl.BlockSpec((1, in_cl, t), lambda b, k: (b, 0, k)),
            pl.BlockSpec((1, in_cg, t), lambda b, k: (b, 0, k)),
        ],
        compiler_params=pltpu.CompilerParams(
            dimension_semantics=("parallel", "parallel")),
    )(xl3, xg3, gl, gg)


# ---------------------------------------------------------------------------
# Module forward
# ---------------------------------------------------------------------------

def ffc_se_forward(params, x_l, x_g, *, force_fallback=False):
    """FastFourierConv2dSE forward on the (x_l, x_g) tuple input (NCHW, f32)."""
    # TODO(synk): the non-tuple input path (id_g == 0 -> y_g = 0) and the
    # in_cl == 0 / in_cg == 0 cases (conv_a2l / conv_a2g is None) are plain
    # Python branching in the reference; only the tuple form used inside FFC
    # (both branches non-empty) is implemented here.
    B, in_cl, H, W = x_l.shape
    in_cg = x_g.shape[1]
    C = in_cl + in_cg
    HW = H * W

    # Pure reshapes of the NCHW storage -- no transposes anywhere.
    xl3 = x_l.reshape(B, in_cl, HW)
    xg3 = x_g.reshape(B, in_cg, HW)
    w1, b1, w2, b2 = params["w1"], params["b1"], params["w2"], params["b2"]

    fused_bytes = 16 * C * HW            # per-step resident estimate (f32)
    if (not force_fallback) and fused_bytes <= _FUSED_VMEM_BUDGET:
        yl3, yg3 = fused_se_gate(xl3, xg3, w1, b1, w2, b2)
    else:
        gates = se_gates_tiled(xl3, xg3, w1, b1, w2, b2)         # (B, C, 1)
        yl3, yg3 = gate_apply(xl3, xg3,
                              gates[:, :in_cl, :], gates[:, in_cl:, :])
    return yl3.reshape(B, in_cl, H, W), yg3.reshape(B, in_cg, H, W)


# ---------------------------------------------------------------------------
# Deterministic parameter init + pure-JAX reference
# ---------------------------------------------------------------------------

def init_params(key, channels=64, ratio_g=0.5, r=16):
    in_cg = int(channels * ratio_g)
    in_cl = channels - in_cg
    ch = channels // r
    k = jax.random.split(key, 4)

    def w(kk, shape, s=0.2):
        return s * jax.random.normal(kk, shape, jnp.float32)

    params = dict(
        w1=w(k[0], (ch, channels)),        # conv1 (1x1): (Ch, C)
        b1=w(k[1], (ch, 1), 0.1),
        w2=w(k[2], (channels, ch)),        # [conv_a2l ; conv_a2g]: (C, Ch)
        b2=w(k[3], (channels, 1), 0.1),
    )
    return params, (in_cl, in_cg, ch)


def reference_forward(params, x_l, x_g):
    """Pure-JAX mirror of the PyTorch module (correctness oracle)."""
    in_cl = x_l.shape[1]
    x = jnp.concatenate([x_l, x_g], axis=1)                      # (B, C, H, W)
    p = jnp.mean(x, axis=(2, 3))                                 # (B, C)
    h = jnp.maximum(p @ params["w1"].T + params["b1"][:, 0], 0.0)
    g = jax.nn.sigmoid(h @ params["w2"].T + params["b2"][:, 0])  # (B, C)
    y = x * g[:, :, None, None]
    return y[:, :in_cl], y[:, in_cl:]


# ---------------------------------------------------------------------------

if __name__ == "__main__":
    key = jax.random.PRNGKey(0)
    kp, kl, kg = jax.random.split(key, 3)
    # channels=64, ratio_g=0.5 -> in_cl = in_cg = 32, squeeze width = 64 // 16 = 4
    params, (in_cl, in_cg, ch) = init_params(kp, channels=64, ratio_g=0.5)

    B, H, W = 2, 16, 16
    x_l = jax.random.normal(kl, (B, in_cl, H, W), jnp.float32)
    x_g = jax.random.normal(kg, (B, in_cg, H, W), jnp.float32)

    r_l, r_g = reference_forward(params, x_l, x_g)

    # Fast (fused) path.
    fwd = jax.jit(functools.partial(ffc_se_forward, params))
    y_l, y_g = fwd(x_l, x_g)
    jax.block_until_ready((y_l, y_g))
    assert y_l.shape == (B, in_cl, H, W) and y_g.shape == (B, in_cg, H, W)
    assert y_l.dtype == jnp.float32 and y_g.dtype == jnp.float32
    assert jnp.allclose(y_l, r_l, atol=1e-4, rtol=1e-4)
    assert jnp.allclose(y_g, r_g, atol=1e-4, rtol=1e-4)

    # Large-image fallback path (HW-tiled pooling + single merged gating call).
    fwd_fb = jax.jit(functools.partial(ffc_se_forward, params, force_fallback=True))
    z_l, z_g = fwd_fb(x_l, x_g)
    jax.block_until_ready((z_l, z_g))
    assert jnp.allclose(z_l, r_l, atol=1e-4, rtol=1e-4)
    assert jnp.allclose(z_g, r_g, atol=1e-4, rtol=1e-4)

    print("KERNEL_OK")
</pallas_src>

<mosaic_0001>
module attributes {stable_mosaic.version = 11 : i64} {
  func.func @_fused_se_gate_kernel(%arg0: i32, %arg1: memref<1x32x256xf32, #tpu.memory_space<vmem>>, %arg2: memref<1x32x256xf32, #tpu.memory_space<vmem>>, %arg3: memref<4x64xf32, #tpu.memory_space<vmem>>, %arg4: memref<4x1xf32, #tpu.memory_space<vmem>>, %arg5: memref<64x4xf32, #tpu.memory_space<vmem>>, %arg6: memref<64x1xf32, #tpu.memory_space<vmem>>, %arg7: memref<1x32x256xf32, #tpu.memory_space<vmem>>, %arg8: memref<1x32x256xf32, #tpu.memory_space<vmem>>) attributes {dimension_semantics = [#tpu.dimension_semantics<parallel>], iteration_bounds = array<i64: 2>, scalar_prefetch = 0 : i64, scratch_operands = 0 : i64, tpu.core_type = #tpu.core_type<tc>, window_params = [{transform_indices = @transform_0, window_bounds = array<i64: 1, 32, 256>}, {transform_indices = @transform_1, window_bounds = array<i64: 1, 32, 256>}, {pipeline_mode = #tpu.pipeline_mode<synchronous>, transform_indices = @transform_2, window_bounds = array<i64: 4, 64>}, {pipeline_mode = #tpu.pipeline_mode<synchronous>, transform_indices = @transform_3, window_bounds = array<i64: 4, 1>}, {pipeline_mode = #tpu.pipeline_mode<synchronous>, transform_indices = @transform_4, window_bounds = array<i64: 64, 4>}, {pipeline_mode = #tpu.pipeline_mode<synchronous>, transform_indices = @transform_5, window_bounds = array<i64: 64, 1>}, {transform_indices = @transform_6, window_bounds = array<i64: 1, 32, 256>}, {transform_indices = @transform_7, window_bounds = array<i64: 1, 32, 256>}]} {
    %c0 = arith.constant 0 : index
    %c0_0 = arith.constant 0 : index
    %c0_1 = arith.constant 0 : index
    %0 = vector.load %arg1[%c0, %c0_0, %c0_1] : memref<1x32x256xf32, #tpu.memory_space<vmem>>, vector<1x32x256xf32>
    %1 = vector.shape_cast %0 : vector<1x32x256xf32> to vector<32x256xf32>
    %c0_2 = arith.constant 0 : index
    %c0_3 = arith.constant 0 : index
    %c0_4 = arith.constant 0 : index
    %2 = vector.load %arg2[%c0_2, %c0_3, %c0_4] : memref<1x32x256xf32, #tpu.memory_space<vmem>>, vector<1x32x256xf32>
    %3 = vector.shape_cast %2 : vector<1x32x256xf32> to vector<32x256xf32>
    %cst = arith.constant dense<0.000000e+00> : vector<32xf32>
    %4 = vector.multi_reduction <add>, %1, %cst [1] : vector<32x256xf32> to vector<32xf32>
    %5 = vector.shape_cast %4 : vector<32xf32> to vector<32x1xf32>
    %cst_5 = arith.constant 2.560000e+02 : f32
    %6 = vector.broadcast %cst_5 : f32 to vector<32x1xf32>
    %7 = arith.divf %5, %6 : vector<32x1xf32>
    %cst_6 = arith.constant dense<0.000000e+00> : vector<32xf32>
    %8 = vector.multi_reduction <add>, %3, %cst_6 [1] : vector<32x256xf32> to vector<32xf32>
    %9 = vector.shape_cast %8 : vector<32xf32> to vector<32x1xf32>
    %cst_7 = arith.constant 2.560000e+02 : f32
    %10 = vector.broadcast %cst_7 : f32 to vector<32x1xf32>
    %11 = arith.divf %9, %10 : vector<32x1xf32>
    %12 = tpu.concatenate %7, %11 in 0 : vector<32x1xf32>, vector<32x1xf32> -> vector<64x1xf32>
    %c0_8 = arith.constant 0 : index
    %c0_9 = arith.constant 0 : index
    %13 = vector.load %arg3[%c0_8, %c0_9] : memref<4x64xf32, #tpu.memory_space<vmem>>, vector<4x64xf32>
    %cst_10 = arith.constant dense<0.000000e+00> : vector<4x1xf32>
    %14 = tpu.matmul %13, %12, %cst_10 {dimension_numbers = #tpu.dot_dimension_numbers<[1], [0], [0], [1], [0, 0, 1, 1], [], []>} : vector<4x64xf32>, vector<64x1xf32>, vector<4x1xf32> -> vector<4x1xf32>
    %c0_11 = arith.constant 0 : index
    %c0_12 = arith.constant 0 : index
    %15 = vector.load %arg4[%c0_11, %c0_12] : memref<4x1xf32, #tpu.memory_space<vmem>>, vector<4x1xf32>
    %16 = arith.addf %14, %15 : vector<4x1xf32>
    %cst_13 = arith.constant 0.000000e+00 : f32
    %17 = vector.broadcast %cst_13 : f32 to vector<4x1xf32>
    %18 = arith.maximumf %16, %17 : vector<4x1xf32>
    %c0_14 = arith.constant 0 : index
    %c0_15 = arith.constant 0 : index
    %19 = vector.load %arg5[%c0_14, %c0_15] : memref<64x4xf32, #tpu.memory_space<vmem>>, vector<64x4xf32>
    %cst_16 = arith.constant dense<0.000000e+00> : vector<64x1xf32>
    %20 = tpu.matmul %19, %18, %cst_16 {dimension_numbers = #tpu.dot_dimension_numbers<[1], [0], [0], [1], [0, 0, 1, 1], [], []>} : vector<64x4xf32>, vector<4x1xf32>, vector<64x1xf32> -> vector<64x1xf32>
    %c0_17 = arith.constant 0 : index
    %c0_18 = arith.constant 0 : index
    %21 = vector.load %arg6[%c0_17, %c0_18] : memref<64x1xf32, #tpu.memory_space<vmem>>, vector<64x1xf32>
    %22 = arith.addf %20, %21 : vector<64x1xf32>
    %23 = arith.negf %22 : vector<64x1xf32>
    %24 = math.exp %23 : vector<64x1xf32>
    %cst_19 = arith.constant 1.000000e+00 : f32
    %25 = vector.broadcast %cst_19 : f32 to vector<64x1xf32>
    %26 = arith.addf %25, %24 : vector<64x1xf32>
    %27 = arith.divf %25, %26 : vector<64x1xf32>
    %28 = vector.extract_strided_slice %27 {offsets = [0, 0], sizes = [32, 1], strides = [1, 1]} : vector<64x1xf32> to vector<32x1xf32>
    %29 = vector.broadcast %28 : vector<32x1xf32> to vector<32x256xf32>
    %30 = arith.mulf %1, %29 : vector<32x256xf32>
    %c0_20 = arith.constant 0 : index
    %c0_21 = arith.constant 0 : index
    %c0_22 = arith.constant 0 : index
    %31 = vector.load %arg7[%c0_20, %c0_21, %c0_22] : memref<1x32x256xf32, #tpu.memory_space<vmem>>, vector<1x32x256xf32>
    %32 = vector.shape_cast %31 : vector<1x32x256xf32> to vector<32x256xf32>
    %33 = vector.shape_cast %30 : vector<32x256xf32> to vector<1x32x256xf32>
    tpu.vector_store %arg7[%c0_20, %c0_21, %c0_22], %33 {strides = array<i32>} : memref<1x32x256xf32, #tpu.memory_space<vmem>>, vector<1x32x256xf32>,
    %34 = vector.extract_strided_slice %27 {offsets = [32, 0], sizes = [32, 1], strides = [1, 1]} : vector<64x1xf32> to vector<32x1xf32>
    %35 = vector.broadcast %34 : vector<32x1xf32> to vector<32x256xf32>
    %36 = arith.mulf %3, %35 : vector<32x256xf32>
    %c0_23 = arith.constant 0 : index
    %c0_24 = arith.constant 0 : index
    %c0_25 = arith.constant 0 : index
    %37 = vector.load %arg8[%c0_23, %c0_24, %c0_25] : memref<1x32x256xf32, #tpu.memory_space<vmem>>, vector<1x32x256xf32>
    %38 = vector.shape_cast %37 : vector<1x32x256xf32> to vector<32x256xf32>
    %39 = vector.shape_cast %36 : vector<32x256xf32> to vector<1x32x256xf32>
    tpu.vector_store %arg8[%c0_23, %c0_24, %c0_25], %39 {strides = array<i32>} : memref<1x32x256xf32, #tpu.memory_space<vmem>>, vector<1x32x256xf32>,
    return
  }
  func.func @transform_0(%arg0: i32) -> (i32, i32, i32) {
    %c0_i32 = arith.constant 0 : i32
    %c0_i32_0 = arith.constant 0 : i32
    %c0_i32_1 = arith.constant 0 : i32
    return %arg0, %c0_i32, %c0_i32_0 : i32, i32, i32
  }
  func.func @transform_1(%arg0: i32) -> (i32, i32, i32) {
    %c0_i32 = arith.constant 0 : i32
    %c0_i32_0 = arith.constant 0 : i32
    %c0_i32_1 = arith.constant 0 : i32
    return %arg0, %c0_i32, %c0_i32_0 : i32, i32, i32
  }
  func.func @transform_2(%arg0: i32) -> (i32, i32) {
    %c0_i32 = arith.constant 0 : i32
    %c0_i32_0 = arith.constant 0 : i32
    %c0_i32_1 = arith.constant 0 : i32
    return %c0_i32, %c0_i32_0 : i32, i32
  }
  func.func @transform_3(%arg0: i32) -> (i32, i32) {
    %c0_i32 = arith.constant 0 : i32
    %c0_i32_0 = arith.constant 0 : i32
    %c0_i32_1 = arith.constant 0 : i32
    return %c0_i32, %c0_i32_0 : i32, i32
  }
  func.func @transform_4(%arg0: i32) -> (i32, i32) {
    %c0_i32 = arith.constant 0 : i32
    %c0_i32_0 = arith.constant 0 : i32
    %c0_i32_1 = arith.constant 0 : i32
    return %c0_i32, %c0_i32_0 : i32, i32
  }
  func.func @transform_5(%arg0: i32) -> (i32, i32) {
    %c0_i32 = arith.constant 0 : i32
    %c0_i32_0 = arith.constant 0 : i32
    %c0_i32_1 = arith.constant 0 : i32
    return %c0_i32, %c0_i32_0 : i32, i32
  }
  func.func @transform_6(%arg0: i32) -> (i32, i32, i32) {
    %c0_i32 = arith.constant 0 : i32
    %c0_i32_0 = arith.constant 0 : i32
    %c0_i32_1 = arith.constant 0 : i32
    return %arg0, %c0_i32, %c0_i32_0 : i32, i32, i32
  }
  func.func @transform_7(%arg0: i32) -> (i32, i32, i32) {
    %c0_i32 = arith.constant 0 : i32
    %c0_i32_0 = arith.constant 0 : i32
    %c0_i32_1 = arith.constant 0 : i32
    return %arg0, %c0_i32, %c0_i32_0 : i32, i32, i32
  }
}

</mosaic_0001>

<llo_original>
// kernel: ffc_se_forward.1
$region0: #{ffc_se_forward.1}
  #allocation0 [shape = 'u32[]', space=smem, size = 0x4, offset = 0x4, fixed_abs, tag = 'smem constant byte address 0x4 - core index']
  #allocation1 [shape = 'u32[144,128]{1,0:T(1,128)}', space=vmem, size = 0x12000, scoped, tag = 'internal scratch']
  %s0 = inlined_call_operand.vmem [shape: f32[2,32,256], index: 0, kind: input, shape index: {}]
  %s1 = inlined_call_operand.vmem [shape: f32[2,32,256], index: 1, kind: input, shape index: {}]
  %s2 = inlined_call_operand.vmem [shape: f32[4,64], index: 2, kind: input, shape index: {}]
  %s3 = inlined_call_operand.vmem [shape: f32[4,1], index: 3, kind: input, shape index: {}]
  %s4 = inlined_call_operand.vmem [shape: f32[64,4], index: 4, kind: input, shape index: {}]
  %s5 = inlined_call_operand.vmem [shape: f32[64,1], index: 5, kind: input, shape index: {}]
  %s6 = inlined_call_operand.vmem [shape: f32[2,32,256], index: 6, kind: output, shape index: {0}]
  %s7 = inlined_call_operand.vmem [shape: f32[2,32,256], index: 7, kind: output, shape index: {1}]
  %8 = xla_tuple %s6, %s7
  %s9 = sld [smem:[#allocation0]]
  $region65: #{ffc_se_forward.1} parent=0
    _
  %s11 = ssub.s32 1, %s9
  %s12 = scalar_select 0, %s11, %s9
  loop: start=0, step=1, limit=4
  $region2: #{ffc_se_forward.1} parent=0 // loop_pre_header
    _
  $region3: #{ffc_se_forward.1} parent=0 // loop_header
    %s14 = sphi 0, %s18
    %p15 = scmp.ge.s32.totalorder %s14, 4
    %s24 = sphi 0, %s26
    %s27 = sphi 0, %s24
    %s28 = sphi 0, %s27
    %s44 = sphi 0, %s28
    %s50 = sphi 0, %s52
    %s53 = sphi 0, %s50
    %s54 = sphi 0, %s53
    %s70 = sphi 0, %s54
    %s74 = sphi 0, %s74
    %s76 = sphi 0, %s74
    %s77 = sphi 0, %s76
    %s91 = sphi 0, %s77
    %s95 = sphi 0, %s95
    %s97 = sphi 0, %s95
    %s98 = sphi 0, %s97
    %s112 = sphi 0, %s98
    %s116 = sphi 0, %s116
    %s118 = sphi 0, %s116
    %s119 = sphi 0, %s118
    %s133 = sphi 0, %s119
    %s137 = sphi 0, %s137
    %s139 = sphi 0, %s137
    %s140 = sphi 0, %s139
    %s154 = sphi 0, %s140
    %s160 = sphi 0, %s162
    %s163 = sphi 0, %s160
    %s164 = sphi 0, %s163
    %s180 = sphi 0, %s164
    %s186 = sphi 0, %s188
    %s189 = sphi 0, %s186
    %s190 = sphi 0, %s189
    %s206 = sphi 0, %s190
  $region4: #{ffc_se_forward.1} parent=0 // loop_header_branch
    %17 = sbr.rel (%p15) target = $region8
  $region5: #{ffc_se_forward.1} parent=0 // loop_body
    %s19 = ssub.s32 %s14, 1
    %s20 = ssub.s32 %s14, 2
    %s21 = sadd.s32 %s14, 1
    %s22 = ssub.s32 %s14, %s21
    %p23 = scmp.eq.s32.totalorder %s22, 0
    %s25 = sadd.s32 %s24, 1
    %s26 = scalar_select %p23, %s24, %s25
    %p29 = pneg %p23
    %p30 = scmp.eq.s32.totalorder %s14, 1
    %p31 = por %p29, %p30
    %p32 = scmp.ne.s32.totalorder %s24, %s27
    %p33 = scmp.eq.s32.totalorder %s14, 0
    %p34 = por %p32, %p33
    %p35 = scmp.ne.s32.totalorder %s24, %s27
    %p36 = scmp.eq.s32.totalorder %s19, 1
    %p37 = por %p35, %p36
    %p38 = scmp.ne.s32.totalorder %s27, %s28
    %p39 = scmp.eq.s32.totalorder %s19, 0
    %p40 = por %p38, %p39
    %p41 = scmp.ne.s32.totalorder %s27, %s28
    %p42 = scmp.eq.s32.totalorder %s20, 1
    %p43 = por %p41, %p42
    %p45 = scmp.ne.s32.totalorder %s28, %s44
    %p46 = scmp.eq.s32.totalorder %s20, 0
    %p47 = por %p45, %p46
    %s48 = ssub.s32 %s14, %s21
    %p49 = scmp.eq.s32.totalorder %s48, 0
    %s51 = sadd.s32 %s50, 1
    %s52 = scalar_select %p49, %s50, %s51
    %p55 = pneg %p49
    %p56 = scmp.eq.s32.totalorder %s14, 1
    %p57 = por %p55, %p56
    %p58 = scmp.ne.s32.totalorder %s50, %s53
    %p59 = scmp.eq.s32.totalorder %s14, 0
    %p60 = por %p58, %p59
    %p61 = scmp.ne.s32.totalorder %s50, %s53
    %p62 = scmp.eq.s32.totalorder %s19, 1
    %p63 = por %p61, %p62
    %p64 = scmp.ne.s32.totalorder %s53, %s54
    %p65 = scmp.eq.s32.totalorder %s19, 0
    %p66 = por %p64, %p65
    %p67 = scmp.ne.s32.totalorder %s53, %s54
    %p68 = scmp.eq.s32.totalorder %s20, 1
    %p69 = por %p67, %p68
    %p71 = scmp.ne.s32.totalorder %s54, %s70
    %p72 = scmp.eq.s32.totalorder %s20, 0
    %p73 = por %p71, %p72
    %s75 = sadd.s32 %s74, 1
    %p78 = scmp.eq.s32.totalorder %s14, 1
    %p79 = scmp.ne.s32.totalorder %s74, %s76
    %p80 = scmp.eq.s32.totalorder %s14, 0
    %p81 = por %p79, %p80
    %p82 = scmp.ne.s32.totalorder %s74, %s76
    %p83 = scmp.eq.s32.totalorder %s19, 1
    %p84 = por %p82, %p83
    %p85 = scmp.ne.s32.totalorder %s76, %s77
    %p86 = scmp.eq.s32.totalorder %s19, 0
    %p87 = por %p85, %p86
    %p88 = scmp.ne.s32.totalorder %s76, %s77
    %p89 = scmp.eq.s32.totalorder %s20, 1
    %p90 = por %p88, %p89
    %p92 = scmp.ne.s32.totalorder %s77, %s91
    %p93 = scmp.eq.s32.totalorder %s20, 0
    %p94 = por %p92, %p93
    %s96 = sadd.s32 %s95, 1
    %p99 = scmp.eq.s32.totalorder %s14, 1
    %p100 = scmp.ne.s32.totalorder %s95, %s97
    %p101 = scmp.eq.s32.totalorder %s14, 0
    %p102 = por %p100, %p101
    %p103 = scmp.ne.s32.totalorder %s95, %s97
    %p104 = scmp.eq.s32.totalorder %s19, 1
    %p105 = por %p103, %p104
    %p106 = scmp.ne.s32.totalorder %s97, %s98
    %p107 = scmp.eq.s32.totalorder %s19, 0
    %p108 = por %p106, %p107
    %p109 = scmp.ne.s32.totalorder %s97, %s98
    %p110 = scmp.eq.s32.totalorder %s20, 1
    %p111 = por %p109, %p110
    %p113 = scmp.ne.s32.totalorder %s98, %s112
    %p114 = scmp.eq.s32.totalorder %s20, 0
    %p115 = por %p113, %p114
    %s117 = sadd.s32 %s116, 1
    %p120 = scmp.eq.s32.totalorder %s14, 1
    %p121 = scmp.ne.s32.totalorder %s116, %s118
    %p122 = scmp.eq.s32.totalorder %s14, 0
    %p123 = por %p121, %p122
    %p124 = scmp.ne.s32.totalorder %s116, %s118
    %p125 = scmp.eq.s32.totalorder %s19, 1
    %p126 = por %p124, %p125
    %p127 = scmp.ne.s32.totalorder %s118, %s119
    %p128 = scmp.eq.s32.totalorder %s19, 0
    %p129 = por %p127, %p128
    %p130 = scmp.ne.s32.totalorder %s118, %s119
    %p131 = scmp.eq.s32.totalorder %s20, 1
    %p132 = por %p130, %p131
    %p134 = scmp.ne.s32.totalorder %s119, %s133
    %p135 = scmp.eq.s32.totalorder %s20, 0
    %p136 = por %p134, %p135
    %s138 = sadd.s32 %s137, 1
    %p141 = scmp.eq.s32.totalorder %s14, 1
    %p142 = scmp.ne.s32.totalorder %s137, %s139
    %p143 = scmp.eq.s32.totalorder %s14, 0
    %p144 = por %p142, %p143
    %p145 = scmp.ne.s32.totalorder %s137, %s139
    %p146 = scmp.eq.s32.totalorder %s19, 1
    %p147 = por %p145, %p146
    %p148 = scmp.ne.s32.totalorder %s139, %s140
    %p149 = scmp.eq.s32.totalorder %s19, 0
    %p150 = por %p148, %p149
    %p151 = scmp.ne.s32.totalorder %s139, %s140
    %p152 = scmp.eq.s32.totalorder %s20, 1
    %p153 = por %p151, %p152
    %p155 = scmp.ne.s32.totalorder %s140, %s154
    %p156 = scmp.eq.s32.totalorder %s20, 0
    %p157 = por %p155, %p156
    %s158 = ssub.s32 %s14, %s21
    %p159 = scmp.eq.s32.totalorder %s158, 0
    %s161 = sadd.s32 %s160, 1
    %s162 = scalar_select %p159, %s160, %s161
    %p165 = pneg %p159
    %p166 = scmp.eq.s32.totalorder %s14, 1
    %p167 = por %p165, %p166
    %p168 = scmp.ne.s32.totalorder %s160, %s163
    %p169 = scmp.eq.s32.totalorder %s14, 0
    %p170 = por %p168, %p169
    %p171 = scmp.ne.s32.totalorder %s160, %s163
    %p172 = scmp.eq.s32.totalorder %s19, 1
    %p173 = por %p171, %p172
    %p174 = scmp.ne.s32.totalorder %s163, %s164
    %p175 = scmp.eq.s32.totalorder %s19, 0
    %p176 = por %p174, %p175
    %p177 = scmp.ne.s32.totalorder %s163, %s164
    %p178 = scmp.eq.s32.totalorder %s20, 1
    %p179 = por %p177, %p178
    %p181 = scmp.ne.s32.totalorder %s164, %s180
    %p182 = scmp.eq.s32.totalorder %s20, 0
    %p183 = por %p181, %p182
    %s184 = ssub.s32 %s14, %s21
    %p185 = scmp.eq.s32.totalorder %s184, 0
    %s187 = sadd.s32 %s186, 1
    %s188 = scalar_select %p185, %s186, %s187
    %p191 = pneg %p185
    %p192 = scmp.eq.s32.totalorder %s14, 1
    %p193 = por %p191, %p192
    %p194 = scmp.ne.s32.totalorder %s186, %s189
    %p195 = scmp.eq.s32.totalorder %s14, 0
    %p196 = por %p194, %p195
    %p197 = scmp.ne.s32.totalorder %s186, %s189
    %p198 = scmp.eq.s32.totalorder %s19, 1
    %p199 = por %p197, %p198
    %p200 = scmp.ne.s32.totalorder %s189, %s190
    %p201 = scmp.eq.s32.totalorder %s19, 0
    %p202 = por %p200, %p201
    %p203 = scmp.ne.s32.totalorder %s189, %s190
    %p204 = scmp.eq.s32.totalorder %s20, 1
    %p205 = por %p203, %p204
    %p207 = scmp.ne.s32.totalorder %s190, %s206
    %p208 = scmp.eq.s32.totalorder %s20, 0
    %p209 = por %p207, %p208
    %p210 = scmp.le.s32.totalorder 1, %s14
    %p211 = scmp.lt.s32.totalorder %s14, 3
    %p212 = pnand %p210, %p211
    %p213 = pneg %p212
    // Predicated region
    $region9: #{ffc_se_forward.1} parent=5 // pred_check
      _
    $region10: #{ffc_se_forward.1} parent=5 // pred_check_branch
      %215 = sbr.rel (%p212) target = $region12
    $region11: #{ffc_se_forward.1} parent=5 // pred_region
      %s216 = ssub.s32 %s14, 1
      // Predicated region
      $region13: #{ffc_se_forward.1} parent=11 // pred_check
        %p217 = pneg %p87
      $region14: #{ffc_se_forward.1} parent=11 // pred_check_branch
        %219 = sbr.rel (%p217) target = $region16
      $region15: #{ffc_se_forward.1} parent=11 // pred_region
        _
      $region16: #{ffc_se_forward.1} parent=11 // pred_fallthru
        _
      // Predicated region
      $region17: #{ffc_se_forward.1} parent=11 // pred_check
        %p220 = pneg %p108
      $region18: #{ffc_se_forward.1} parent=11 // pred_check_branch
        %222 = sbr.rel (%p220) target = $region20
      $region19: #{ffc_se_forward.1} parent=11 // pred_region
        _
      $region20: #{ffc_se_forward.1} parent=11 // pred_fallthru
        _
      // Predicated region
      $region21: #{ffc_se_forward.1} parent=11 // pred_check
        %p223 = pneg %p129
      $region22: #{ffc_se_forward.1} parent=11 // pred_check_branch
        %225 = sbr.rel (%p223) target = $region24
      $region23: #{ffc_se_forward.1} parent=11 // pred_region
        _
      $region24: #{ffc_se_forward.1} parent=11 // pred_fallthru
        _
      // Predicated region
      $region25: #{ffc_se_forward.1} parent=11 // pred_check
        %p226 = pneg %p150
      $region26: #{ffc_se_forward.1} parent=11 // pred_check_branch
        %228 = sbr.rel (%p226) target = $region28
      $region27: #{ffc_se_forward.1} parent=11 // pred_region
        _
      $region28: #{ffc_se_forward.1} parent=11 // pred_fallthru
        _
    $region12: #{ffc_se_forward.1} parent=5 // pred_fallthru
      _
    %p229 = scmp.lt.s32.totalorder %s14, 2
    // Predicated region
    $region29: #{ffc_se_forward.1} parent=5 // pred_check
      %p230 = pneg %p229
    $region30: #{ffc_se_forward.1} parent=5 // pred_check_branch
      %232 = sbr.rel (%p230) target = $region32
    $region31: #{ffc_se_forward.1} parent=5 // pred_region
      // Predicated region
      $region33: #{ffc_se_forward.1} parent=31 // pred_check
        %p233 = pneg %p34
      $region34: #{ffc_se_forward.1} parent=31 // pred_check_branch
        %235 = sbr.rel (%p233) target = $region36
      $region35: #{ffc_se_forward.1} parent=31 // pred_region
        %p236 = scmp.lt.s32.totalorder %s14, 1
        %s237 = scalar_select %p236, %s14, 1
        %s238 = smul.addr %s237, 8
        %s239 = smul.addr %s238, 8
        %s240 = scalar_lea.vmem %s0, %s239
      $region36: #{ffc_se_forward.1} parent=31 // pred_fallthru
        _
      // Predicated region
      $region37: #{ffc_se_forward.1} parent=31 // pred_check
        %p241 = pneg %p60
      $region38: #{ffc_se_forward.1} parent=31 // pred_check_branch
        %243 = sbr.rel (%p241) target = $region40
      $region39: #{ffc_se_forward.1} parent=31 // pred_region
        %p244 = scmp.lt.s32.totalorder %s14, 1
        %s245 = scalar_select %p244, %s14, 1
        %s246 = smul.addr %s245, 8
        %s247 = smul.addr %s246, 8
        %s248 = scalar_lea.vmem %s1, %s247
      $region40: #{ffc_se_forward.1} parent=31 // pred_fallthru
        _
    $region32: #{ffc_se_forward.1} parent=5 // pred_fallthru
      _
    %p249 = scmp.le.s32.totalorder 1, %s14
    %p250 = scmp.lt.s32.totalorder %s14, 3
    %p251 = pnand %p249, %p250
    %p252 = pneg %p251
    // Predicated region
    $region41: #{ffc_se_forward.1} parent=5 // pred_check
      _
    $region42: #{ffc_se_forward.1} parent=5 // pred_check_branch
      %254 = sbr.rel (%p251) target = $region44
    $region43: #{ffc_se_forward.1} parent=5 // pred_region
      %s255 = ssub.s32 %s14, 1
      %p256 = scmp.lt.s32.totalorder %s19, 1
      %s257 = scalar_select %p256, %s19, 1
      %s258 = smul.addr %s257, 8
      %s259 = smul.addr %s258, 8
      %s260 = scalar_lea.vmem %s0, %s259
      %p261 = pneg %p40
      %p262 = pneg %p37
      %p263 = scmp.lt.s32.totalorder %s19, 1
      %s264 = scalar_select %p263, %s19, 1
      %s265 = smul.addr %s264, 8
      %s266 = smul.addr %s265, 8
      %s267 = scalar_lea.vmem %s1, %s266
      %p268 = pneg %p66
      %p269 = pneg %p63
      %p270 = pneg %p87
      %p271 = pneg %p84
      %p272 = pneg %p108
      %p273 = pneg %p105
      %p274 = pneg %p129
      %p275 = pneg %p126
      %p276 = pneg %p150
      %p277 = pneg %p147
      %p278 = pneg %p176
      %p279 = pneg %p173
      %p280 = scmp.lt.s32.totalorder %s19, 1
      %s281 = scalar_select %p280, %s19, 1
      %s282 = smul.addr %s281, 8
      %s283 = smul.addr %s282, 8
      %s284 = scalar_lea.vmem %s6, %s283
      %p285 = pneg %p202
      %p286 = pneg %p199
      %p287 = scmp.lt.s32.totalorder %s19, 1
      %s288 = scalar_select %p287, %s19, 1
      %s289 = smul.addr %s288, 8
      %s290 = smul.addr %s289, 8
      %s291 = scalar_lea.vmem %s7, %s290
      %p292 = scmp.lt.s32.totalorder %s19, 1
      %s293 = scalar_select %p292, %s19, 1
      %s294 = smul.addr %s293, 8
      %s295 = smul.addr %s294, 8
      %s296 = scalar_lea.vmem %s0, %s295
      %p297 = scmp.lt.s32.totalorder %s19, 1
      %s298 = scalar_select %p297, %s19, 1
      %s299 = smul.addr %s298, 8
      %s300 = smul.addr %s299, 8
      %s301 = scalar_lea.vmem %s1, %s300
      %p302 = scmp.lt.s32.totalorder %s19, 1
      %s303 = scalar_select %p302, %s19, 1
      %s304 = smul.addr %s303, 8
      %s305 = smul.addr %s304, 8
      %s306 = scalar_lea.vmem %s6, %s305
      %p307 = scmp.lt.s32.totalorder %s19, 1
      %s308 = scalar_select %p307, %s19, 1
      %s309 = smul.addr %s308, 8
      %s310 = smul.addr %s309, 8
      %s311 = scalar_lea.vmem %s7, %s310
      %v312 = vld [vmem:[%s296] sm:$0xff]
      %v313 = vld [vmem:[%s296 + $0x8] sm:$0xff]
      %v314 = vld [vmem:[%s296 + $0x10] sm:$0xff]
      %v315 = vld [vmem:[%s296 + $0x18] sm:$0xff]
      %v316 = vld [vmem:[%s296 + $0x20] sm:$0xff]
      %v317 = vld [vmem:[%s296 + $0x28] sm:$0xff]
      %v318 = vld [vmem:[%s296 + $0x30] sm:$0xff]
      %v319 = vld [vmem:[%s296 + $0x38] sm:$0xff]
      %v320 = vld [vmem:[%s301] sm:$0xff]
      %v321 = vld [vmem:[%s301 + $0x8] sm:$0xff]
      %v322 = vld [vmem:[%s301 + $0x10] sm:$0xff]
      %v323 = vld [vmem:[%s301 + $0x18] sm:$0xff]
      %v324 = vld [vmem:[%s301 + $0x20] sm:$0xff]
      %v325 = vld [vmem:[%s301 + $0x28] sm:$0xff]
      %v326 = vld [vmem:[%s301 + $0x30] sm:$0xff]
      %v327 = vld [vmem:[%s301 + $0x38] sm:$0xff]
      %v328 = vadd.f32 %v312, %v313
      %329 = vadd.xlane.f32.xlu0 %v328
      %v330 = vpop.xlane.xlu0 %329
      %v331 = vadd.f32 %v314, %v315
      %332 = vadd.xlane.f32.xlu0 %v331
      %v333 = vpop.xlane.xlu0 %332
      %v334 = vadd.f32 %v316, %v317
      %335 = vadd.xlane.f32.xlu0 %v334
      %v336 = vpop.xlane.xlu0 %335
      %v337 = vadd.f32 %v318, %v319
      %338 = vadd.xlane.f32.xlu0 %v337
      %v339 = vpop.xlane.xlu0 %338
      %v340 = vrcp.pop 256.0
      %v341 = vmul.f32 %v330, %v340
      %v342 = vmul.f32 %v333, %v340
      %v343 = vmul.f32 %v336, %v340
      %v344 = vmul.f32 %v339, %v340
      %v345 = vadd.f32 %v320, %v321
      %346 = vadd.xlane.f32.xlu0 %v345
      %v347 = vpop.xlane.xlu0 %346
      %v348 = vadd.f32 %v322, %v323
      %349 = vadd.xlane.f32.xlu0 %v348
      %v350 = vpop.xlane.xlu0 %349
      %v351 = vadd.f32 %v324, %v325
      %352 = vadd.xlane.f32.xlu0 %v351
      %v353 = vpop.xlane.xlu0 %352
      %v354 = vadd.f32 %v326, %v327
      %355 = vadd.xlane.f32.xlu0 %v354
      %v356 = vpop.xlane.xlu0 %355
      %v357 = vmul.f32 %v347, %v340
      %v358 = vmul.f32 %v350, %v340
      %v359 = vmul.f32 %v353, %v340
      %v360 = vmul.f32 %v356, %v340
      %v361 = vld [vmem:[%s2] sm:$0xf]
      %v362 = vld [vmem:[%s3] sm:$0xf]
      %vm363 = vcmask 523264
      %v365 = vsel %vm363, %v361, 0
      %367 = vmatprep.subr.mxu0 0.0
      %368 = vmatpush1.msra.mxu0 %v341
      %369 = vmatprep.subr.mxu0 0.0
      %370 = vmatpush1.msra.mxu0 %v342
      %371 = vmatprep.subr.mxu0 0.0
      %372 = vmatpush1.msra.mxu0 %v343
      %373 = vmatprep.subr.mxu0 0.0
      %374 = vmatpush1.msra.mxu0 %v344
      %375 = vmatprep.subr.mxu0 0.0
      %376 = vmatpush1.msra.mxu0 %v357
      %377 = vmatprep.subr.mxu0 0.0
      %378 = vmatpush1.msra.mxu0 %v358
      %379 = vmatprep.subr.mxu0 0.0
      %380 = vmatpush1.msra.mxu0 %v359
      %381 = vmatprep.subr.mxu0 0.0
      %382 = vmatpush1.msra.mxu0 %v360
      %383 = vmatprep.subr.mxu0 0.0
      %384 = vmatpush1.msra.mxu0 0.0
      %385 = vmatprep.subr.mxu0 0.0
      %386 = vmatpush1.msra.mxu0 0.0
      %387 = vmatprep.subr.mxu0 0.0
      %388 = vmatpush1.msra.mxu0 0.0
      %389 = vmatprep.subr.mxu0 0.0
      %390 = vmatpush1.msra.mxu0 0.0
      %391 = vmatprep.subr.mxu0 0.0
      %392 = vmatpush1.msra.mxu0 0.0
      %393 = vmatprep.subr.mxu0 0.0
      %394 = vmatpush1.msra.mxu0 0.0
      %395 = vmatprep.subr.mxu0 0.0
      %396 = vmatpush1.msra.mxu0 0.0
      %397 = vmatprep.subr.mxu0 0.0
      %398 = vmatpush1.msra.mxu0 0.0
      %399 = vmatprep.subr.mxu0 0.0
      %400 = vmatpush1.msra.mxu0 0.0
      %401 = vmatprep.subr.mxu0 0.0
      %402 = vmatpush1.msra.mxu0 0.0
      %403 = vmatprep.subr.mxu0 0.0
      %404 = vmatpush1.msra.mxu0 0.0
      %405 = vmatprep.subr.mxu0 0.0
      %406 = vmatpush1.msra.mxu0 0.0
      %407 = vmatprep.subr.mxu0 0.0
      %408 = vmatpush1.msra.mxu0 0.0
      %409 = vmatprep.subr.mxu0 0.0
      %410 = vmatpush1.msra.mxu0 0.0
      %411 = vmatprep.subr.mxu0 0.0
      %412 = vmatpush1.msra.mxu0 0.0
      %413 = vmatprep.subr.mxu0 0.0
      %414 = vmatpush1.msra.mxu0 0.0
      %415 = vmatprep.subr.mxu0 0.0
      %416 = vmatpush1.msra.mxu0 0.0
      %417 = vmatprep.subr.mxu0 0.0
      %418 = vmatpush1.msra.mxu0 0.0
      %419 = vmatprep.subr.mxu0 0.0
      %420 = vmatpush1.msra.mxu0 0.0
      %421 = vmatprep.subr.mxu0 0.0
      %422 = vmatpush1.msra.mxu0 0.0
      %423 = vmatprep.subr.mxu0 0.0
      %424 = vmatpush1.msra.mxu0 0.0
      %425 = vmatprep.subr.mxu0 0.0
      %426 = vmatpush1.msra.mxu0 0.0
      %427 = vmatprep.subr.mxu0 0.0
      %428 = vmatpush1.msra.mxu0 0.0
      %429 = vmatprep.subr.mxu0 0.0
      %430 = vmatpush1.msra.mxu0 0.0
      %431 = vmatprep.mubr.f32.mxu0 0.0
      %432 = vmatmul.mubr.f32.gmra.mrb[0].mxu0 %v365
      %v433 = vpop.f32.mrb[0].mxu0
      %v434 = vadd.f32 %v362, %v433
      %v435 = vpop.f32.mrb[0].mxu0
      %436 = vdwg.mxu0
      %v437 = vmax.f32 %v434, 0.0
      %v438 = vld [vmem:[%s4] sm:$0xff]
      %v439 = vld [vmem:[%s4 + $0x8] sm:$0xff]
      %v440 = vld [vmem:[%s4 + $0x10] sm:$0xff]
      %v441 = vld [vmem:[%s4 + $0x18] sm:$0xff]
      %v442 = vld [vmem:[%s4 + $0x20] sm:$0xff]
      %v443 = vld [vmem:[%s4 + $0x28] sm:$0xff]
      %v444 = vld [vmem:[%s4 + $0x30] sm:$0xff]
      %v445 = vld [vmem:[%s4 + $0x38] sm:$0xff]
      %v446 = vld [vmem:[%s5] sm:$0xff]
      %v447 = vld [vmem:[%s5 + $0x8] sm:$0xff]
      %v448 = vld [vmem:[%s5 + $0x10] sm:$0xff]
      %v449 = vld [vmem:[%s5 + $0x18] sm:$0xff]
      %v450 = vld [vmem:[%s5 + $0x20] sm:$0xff]
      %v451 = vld [vmem:[%s5 + $0x28] sm:$0xff]
      %v452 = vld [vmem:[%s5 + $0x30] sm:$0xff]
      %v453 = vld [vmem:[%s5 + $0x38] sm:$0xff]
      %vm454 = vcmask 31744
      %v456 = vsel %vm454, %v438, 0
      %v459 = vsel %vm454, %v439, 0
      %v462 = vsel %vm454, %v440, 0
      %v465 = vsel %vm454, %v441, 0
      %v468 = vsel %vm454, %v442, 0
      %v471 = vsel %vm454, %v443, 0
      %v474 = vsel %vm454, %v444, 0
      %v477 = vsel %vm454, %v445, 0
      %vm479 = vcmask 1043456
      %v481 = vsel %vm479, %v437, 0
      %483 = vmatprep.subr.mxu0 0.0
      %484 = vmatpush1.msra.mxu0 %v481
      %485 = vmatprep.subr.mxu0 0.0
      %486 = vmatpush1.msra.mxu0 0.0
      %487 = vmatprep.subr.mxu0 0.0
      %488 = vmatpush1.msra.mxu0 0.0
      %489 = vmatprep.subr.mxu0 0.0
      %490 = vmatpush1.msra.mxu0 0.0
      %491 = vmatprep.subr.mxu0 0.0
      %492 = vmatpush1.msra.mxu0 0.0
      %493 = vmatprep.subr.mxu0 0.0
      %494 = vmatpush1.msra.mxu0 0.0
      %495 = vmatprep.subr.mxu0 0.0
      %496 = vmatpush1.msra.mxu0 0.0
      %497 = vmatprep.subr.mxu0 0.0
      %498 = vmatpush1.msra.mxu0 0.0
      %499 = vmatprep.subr.mxu0 0.0
      %500 = vmatpush1.msra.mxu0 0.0
      %501 = vmatprep.subr.mxu0 0.0
      %502 = vmatpush1.msra.mxu0 0.0
      %503 = vmatprep.subr.mxu0 0.0
      %504 = vmatpush1.msra.mxu0 0.0
      %505 = vmatprep.subr.mxu0 0.0
      %506 = vmatpush1.msra.mxu0 0.0
      %507 = vmatprep.subr.mxu0 0.0
      %508 = vmatpush1.msra.mxu0 0.0
      %509 = vmatprep.subr.mxu0 0.0
      %510 = vmatpush1.msra.mxu0 0.0
      %511 = vmatprep.subr.mxu0 0.0
      %512 = vmatpush1.msra.mxu0 0.0
      %513 = vmatprep.subr.mxu0 0.0
      %514 = vmatpush1.msra.mxu0 0.0
      %515 = vmatprep.subr.mxu0 0.0
      %516 = vmatpush1.msra.mxu0 0.0
      %517 = vmatprep.subr.mxu0 0.0
      %518 = vmatpush1.msra.mxu0 0.0
      %519 = vmatprep.subr.mxu0 0.0
      %520 = vmatpush1.msra.mxu0 0.0
      %521 = vmatprep.subr.mxu0 0.0
      %522 = vmatpush1.msra.mxu0 0.0
      %523 = vmatprep.subr.mxu0 0.0
      %524 = vmatpush1.msra.mxu0 0.0
      %525 = vmatprep.subr.mxu0 0.0
      %526 = vmatpush1.msra.mxu0 0.0
      %527 = vmatprep.subr.mxu0 0.0
      %528 = vmatpush1.msra.mxu0 0.0
      %529 = vmatprep.subr.mxu0 0.0
      %530 = vmatpush1.msra.mxu0 0.0
      %531 = vmatprep.subr.mxu0 0.0
      %532 = vmatpush1.msra.mxu0 0.0
      %533 = vmatprep.subr.mxu0 0.0
      %534 = vmatpush1.msra.mxu0 0.0
      %535 = vmatprep.subr.mxu0 0.0
      %536 = vmatpush1.msra.mxu0 0.0
      %537 = vmatprep.subr.mxu0 0.0
      %538 = vmatpush1.msra.mxu0 0.0
      %539 = vmatprep.subr.mxu0 0.0
      %540 = vmatpush1.msra.mxu0 0.0
      %541 = vmatprep.subr.mxu0 0.0
      %542 = vmatpush1.msra.mxu0 0.0
      %543 = vmatprep.subr.mxu0 0.0
      %544 = vmatpush1.msra.mxu0 0.0
      %545 = vmatprep.subr.mxu0 0.0
      %546 = vmatpush1.msra.mxu0 0.0
      %547 = vmatprep.mubr.f32.mxu0 0.0
      %548 = vmatmul.mubr.f32.gmra.mrb[0].mxu0 %v456
      %v549 = vpop.f32.mrb[0].mxu0
      %v550 = vadd.f32 %v446, %v549
      %v551 = vpop.f32.mrb[0].mxu0
      %552 = vmatprep.mubr.f32.mxu0 0.0
      %553 = vmatmul.mubr.f32.gmra.mrb[0].mxu0 %v459
      %v554 = vpop.f32.mrb[0].mxu0
      %v555 = vadd.f32 %v447, %v554
      %v556 = vpop.f32.mrb[0].mxu0
      %557 = vmatprep.mubr.f32.mxu0 0.0
      %558 = vmatmul.mubr.f32.gmra.mrb[0].mxu0 %v462
      %v559 = vpop.f32.mrb[0].mxu0
      %v560 = vadd.f32 %v448, %v559
      %v561 = vpop.f32.mrb[0].mxu0
      %562 = vmatprep.mubr.f32.mxu0 0.0
      %563 = vmatmul.mubr.f32.gmra.mrb[0].mxu0 %v465
      %v564 = vpop.f32.mrb[0].mxu0
      %v565 = vadd.f32 %v449, %v564
      %v566 = vpop.f32.mrb[0].mxu0
      %567 = vmatprep.mubr.f32.mxu0 0.0
      %568 = vmatmul.mubr.f32.gmra.mrb[0].mxu0 %v468
      %v569 = vpop.f32.mrb[0].mxu0
      %v570 = vadd.f32 %v450, %v569
      %v571 = vpop.f32.mrb[0].mxu0
      %572 = vmatprep.mubr.f32.mxu0 0.0
      %573 = vmatmul.mubr.f32.gmra.mrb[0].mxu0 %v471
      %v574 = vpop.f32.mrb[0].mxu0
      %v575 = vadd.f32 %v451, %v574
      %v576 = vpop.f32.mrb[0].mxu0
      %577 = vmatprep.mubr.f32.mxu0 0.0
      %578 = vmatmul.mubr.f32.gmra.mrb[0].mxu0 %v474
      %v579 = vpop.f32.mrb[0].mxu0
      %v580 = vadd.f32 %v452, %v579
      %v581 = vpop.f32.mrb[0].mxu0
      %582 = vmatprep.mubr.f32.mxu0 0.0
      %583 = vmatmul.mubr.f32.gmra.mrb[0].mxu0 %v477
      %v584 = vpop.f32.mrb[0].mxu0
      %v585 = vadd.f32 %v453, %v584
      %v586 = vpop.f32.mrb[0].mxu0
      %587 = vdwg.mxu0
      %v588 = vxor.u32 %v550, 2147483648
      %v589 = vxor.u32 %v555, 2147483648
      %v590 = vxor.u32 %v560, 2147483648
      %v591 = vxor.u32 %v565, 2147483648
      %v592 = vxor.u32 %v570, 2147483648
      %v593 = vxor.u32 %v575, 2147483648
      %v594 = vxor.u32 %v580, 2147483648
      %v595 = vxor.u32 %v585, 2147483648
      %v596 = vmul.f32 %v588, 1.442695
      %v597 = vpow.pop %v596
      %v598 = vmul.f32 %v589, 1.442695
      %v599 = vpow.pop %v598
      %v600 = vmul.f32 %v590, 1.442695
      %v601 = vpow.pop %v600
      %v602 = vmul.f32 %v591, 1.442695
      %v603 = vpow.pop %v602
      %v604 = vmul.f32 %v592, 1.442695
      %v605 = vpow.pop %v604
      %v606 = vmul.f32 %v593, 1.442695
      %v607 = vpow.pop %v606
      %v608 = vmul.f32 %v594, 1.442695
      %v609 = vpow.pop %v608
      %v610 = vmul.f32 %v595, 1.442695
      %v611 = vpow.pop %v610
      %v612 = vadd.f32 %v597, 1.0
      %v613 = vadd.f32 %v599, 1.0
      %v614 = vadd.f32 %v601, 1.0
      %v615 = vadd.f32 %v603, 1.0
      %v616 = vadd.f32 %v605, 1.0
      %v617 = vadd.f32 %v607, 1.0
      %v618 = vadd.f32 %v609, 1.0
      %v619 = vadd.f32 %v611, 1.0
      %v620 = vrcp.pop %v612
      %v621 = vmul.f32 1.0, %v620
      %v622 = vrcp.pop %v613
      %v623 = vmul.f32 1.0, %v622
      %v624 = vrcp.pop %v614
      %v625 = vmul.f32 1.0, %v624
      %v626 = vrcp.pop %v615
      %v627 = vmul.f32 1.0, %v626
      %v628 = vrcp.pop %v616
      %v629 = vmul.f32 1.0, %v628
      %v630 = vrcp.pop %v617
      %v631 = vmul.f32 1.0, %v630
      %v632 = vrcp.pop %v618
      %v633 = vmul.f32 1.0, %v632
      %v634 = vrcp.pop %v619
      %v635 = vmul.f32 1.0, %v634
      %637 = vset.pattern.permute.xlu0 0
      %638 = vperm.xlu0 %637, %v621
      %v639 = vpop.permute.xlu0 %638
      %642 = vset.pattern.permute.xlu0 0
      %643 = vperm.xlu0 %642, %v623
      %v644 = vpop.permute.xlu0 %643
      %647 = vset.pattern.permute.xlu0 0
      %648 = vperm.xlu0 %647, %v625
      %v649 = vpop.permute.xlu0 %648
      %652 = vset.pattern.permute.xlu0 0
      %653 = vperm.xlu0 %652, %v627
      %v654 = vpop.permute.xlu0 %653
      %v656 = vmul.f32 %v312, %v639
      %v657 = vmul.f32 %v313, %v639
      %v658 = vmul.f32 %v314, %v644
      %v659 = vmul.f32 %v315, %v644
      %v660 = vmul.f32 %v316, %v649
      %v661 = vmul.f32 %v317, %v649
      %v662 = vmul.f32 %v318, %v654
      %v663 = vmul.f32 %v319, %v654
      %664 = vst [vmem:[%s306] sm:$0xff] %v656
      %665 = vst [vmem:[%s306 + $0x8] sm:$0xff] %v657
      %666 = vst [vmem:[%s306 + $0x10] sm:$0xff] %v658
      %667 = vst [vmem:[%s306 + $0x18] sm:$0xff] %v659
      %668 = vst [vmem:[%s306 + $0x20] sm:$0xff] %v660
      %669 = vst [vmem:[%s306 + $0x28] sm:$0xff] %v661
      %670 = vst [vmem:[%s306 + $0x30] sm:$0xff] %v662
      %671 = vst [vmem:[%s306 + $0x38] sm:$0xff] %v663
      %673 = vset.pattern.permute.xlu0 0
      %674 = vperm.xlu0 %673, %v629
      %v675 = vpop.permute.xlu0 %674
      %678 = vset.pattern.permute.xlu0 0
      %679 = vperm.xlu0 %678, %v631
      %v680 = vpop.permute.xlu0 %679
      %683 = vset.pattern.permute.xlu0 0
      %684 = vperm.xlu0 %683, %v633
      %v685 = vpop.permute.xlu0 %684
      %688 = vset.pattern.permute.xlu0 0
      %689 = vperm.xlu0 %688, %v635
      %v690 = vpop.permute.xlu0 %689
      %v692 = vmul.f32 %v320, %v675
      %v693 = vmul.f32 %v321, %v675
      %v694 = vmul.f32 %v322, %v680
      %v695 = vmul.f32 %v323, %v680
      %v696 = vmul.f32 %v324, %v685
      %v697 = vmul.f32 %v325, %v685
      %v698 = vmul.f32 %v326, %v690
      %v699 = vmul.f32 %v327, %v690
      %700 = vst [vmem:[%s311] sm:$0xff] %v692
      %701 = vst [vmem:[%s311 + $0x8] sm:$0xff] %v693
      %702 = vst [vmem:[%s311 + $0x10] sm:$0xff] %v694
      %703 = vst [vmem:[%s311 + $0x18] sm:$0xff] %v695
      %704 = vst [vmem:[%s311 + $0x20] sm:$0xff] %v696
      %705 = vst [vmem:[%s311 + $0x28] sm:$0xff] %v697
      %706 = vst [vmem:[%s311 + $0x30] sm:$0xff] %v698
      %707 = vst [vmem:[%s311 + $0x38] sm:$0xff] %v699
      %p708 = scmp.lt.s32.totalorder %s19, 1
      %s709 = scalar_select %p708, %s19, 1
      %s710 = smul.addr %s709, 8
      %s711 = smul.addr %s710, 8
      %s712 = scalar_lea.vmem %s6, %s711
      %p713 = scmp.lt.s32.totalorder %s19, 1
      %s714 = scalar_select %p713, %s19, 1
      %s715 = smul.addr %s714, 8
      %s716 = smul.addr %s715, 8
      %s717 = scalar_lea.vmem %s7, %s716
      // Predicated region
      $region45: #{ffc_se_forward.1} parent=43 // pred_check
        %p718 = pneg %p173
      $region46: #{ffc_se_forward.1} parent=43 // pred_check_branch
        %720 = sbr.rel (%p718) target = $region48
      $region47: #{ffc_se_forward.1} parent=43 // pred_region
        _
      $region48: #{ffc_se_forward.1} parent=43 // pred_fallthru
        _
      // Predicated region
      $region49: #{ffc_se_forward.1} parent=43 // pred_check
        %p721 = pneg %p199
      $region50: #{ffc_se_forward.1} parent=43 // pred_check_branch
        %723 = sbr.rel (%p721) target = $region52
      $region51: #{ffc_se_forward.1} parent=43 // pred_region
        _
      $region52: #{ffc_se_forward.1} parent=43 // pred_fallthru
        _
    $region44: #{ffc_se_forward.1} parent=5 // pred_fallthru
      _
    %p724 = scmp.le.s32.totalorder 2, %s14
    // Predicated region
    $region53: #{ffc_se_forward.1} parent=5 // pred_check
      %p725 = pneg %p724
    $region54: #{ffc_se_forward.1} parent=5 // pred_check_branch
      %727 = sbr.rel (%p725) target = $region56
    $region55: #{ffc_se_forward.1} parent=5 // pred_region
      %s728 = ssub.s32 %s14, 2
      // Predicated region
      $region57: #{ffc_se_forward.1} parent=55 // pred_check
        %p729 = pneg %p179
      $region58: #{ffc_se_forward.1} parent=55 // pred_check_branch
        %731 = sbr.rel (%p729) target = $region60
      $region59: #{ffc_se_forward.1} parent=55 // pred_region
        %p732 = scmp.lt.s32.totalorder %s20, 1
        %s733 = scalar_select %p732, %s20, 1
        %s734 = smul.addr %s733, 8
        %s735 = smul.addr %s734, 8
        %s736 = scalar_lea.vmem %s6, %s735
      $region60: #{ffc_se_forward.1} parent=55 // pred_fallthru
        _
      // Predicated region
      $region61: #{ffc_se_forward.1} parent=55 // pred_check
        %p737 = pneg %p205
      $region62: #{ffc_se_forward.1} parent=55 // pred_check_branch
        %739 = sbr.rel (%p737) target = $region64
      $region63: #{ffc_se_forward.1} parent=55 // pred_region
        %p740 = scmp.lt.s32.totalorder %s20, 1
        %s741 = scalar_select %p740, %s20, 1
        %s742 = smul.addr %s741, 8
        %s743 = smul.addr %s742, 8
        %s744 = scalar_lea.vmem %s7, %s743
      $region64: #{ffc_se_forward.1} parent=55 // pred_fallthru
        _
    $region56: #{ffc_se_forward.1} parent=5 // pred_fallthru
      _
  $region6: #{ffc_se_forward.1} parent=0 // loop_footer
    %s18 = sadd.s32 1, %s14
  $region7: #{ffc_se_forward.1} parent=0 // loop_footer_branch
    %13 = sbr.rel target = $region3
  $region8: #{ffc_se_forward.1} parent=0 // loop_exit
    _

</llo_original>
